<compile_context>
chip_gen: v7x
topology: tpu7x:2x2x1
jax: 0.10.0
libtpu: 0.0.40
codegen_flags: <defaults>
</compile_context>

<pallas_src>
import math
import functools

import jax
import jax.numpy as jnp
from jax import lax
from jax.experimental import pallas as pl
from jax.experimental.pallas import tpu as pltpu


def _mix32(x):
    """lowbias32-style finalizer: cheap, portable uint32 mixing (VPU only)."""
    x = x ^ (x >> 16)
    x = x * jnp.uint32(0x7FEB352D)
    x = x ^ (x >> 15)
    x = x * jnp.uint32(0x846CA68B)
    x = x ^ (x >> 16)
    return x


def _pos_enc_dropout_kernel(seed_ref, x_ref, pe_ref, o_ref, *, p, training,
                            block_rows):
    # x_ref : (TS, B, D) VMEM tile of x
    # pe_ref: (TS, 1, D) VMEM tile of pe (broadcasts over batch)
    y = x_ref[...] + pe_ref[...]          # compute in the input dtype

    if training and p > 0.0:
        shape = y.shape
        # Global sequence-row offset of this tile -> mask is unique per block
        # and independent of tiling / grid execution order.
        row0 = (pl.program_id(0) * block_rows).astype(jnp.uint32)
        i = lax.broadcasted_iota(jnp.int32, shape, 0).astype(jnp.uint32) + row0
        j = lax.broadcasted_iota(jnp.int32, shape, 1).astype(jnp.uint32)
        k = lax.broadcasted_iota(jnp.int32, shape, 2).astype(jnp.uint32)
        seed = seed_ref[0].astype(jnp.uint32)

        h = (i * jnp.uint32(0x9E3779B1)
             + j * jnp.uint32(0x85EBCA77)
             + k * jnp.uint32(0xC2B2AE3D)
             + seed)
        bits = _mix32(h)

        # Integer threshold compare: P(keep) = 1 - p, exact to 2^-32.
        threshold = jnp.uint32(min(int(round(p * 2.0**32)), 2**32 - 1))
        keep = bits >= threshold
        scale = jnp.asarray(1.0 / (1.0 - p), dtype=y.dtype)
        y = y * (keep.astype(y.dtype) * scale)   # inverted dropout, no select

    o_ref[...] = y.astype(o_ref.dtype)


def make_positional_encoding_table(d_model, max_len, dtype=jnp.float32):
    """Same formula as the PyTorch module; returns (max_len, 1, d_model)."""
    position = jnp.arange(0, max_len, dtype=jnp.float32)[:, None]            # (L, 1)
    div_term = jnp.exp(
        jnp.arange(0, d_model, 2, dtype=jnp.float32)
        * (-math.log(10000.0) / d_model))                                    # (D/2,)
    arg = position * div_term                                                # (L, D/2)
    # columns 0::2 = sin, 1::2 = cos
    pe = jnp.stack([jnp.sin(arg), jnp.cos(arg)], axis=-1).reshape(max_len, d_model)
    return pe[:, None, :].astype(dtype)                                      # (L, 1, D)


def positional_encoding_forward(x, pe, *, p=0.1, training=False, seed=0,
                                block_rows=None,
                                vmem_limit_bytes=64 * 1024 * 1024):
    """x: (S, B, D);  pe: (max_len, 1, D).  Returns dropout(x + pe[:S])."""
    S, B, D = x.shape
    # Pre-cast pe to x's dtype so its (small, broadcast) DMA bytes match x.
    pe_slice = pe[:S].astype(x.dtype)                                        # (S, 1, D)

    itemsize = jnp.dtype(x.dtype).itemsize
    if block_rows is None:
        # ~2 MiB per x/out tile -> double-buffered in+out+pe stays well under
        # v7x's 64 MiB VMEM (32 MiB scoped default); plenty of headroom on
        # v5e/v6e.  Larger tiles amortize the ~0.35 us per-grid-step overhead.
        target_bytes = 2 * 1024 * 1024
        block_rows = max(1, min(S, target_bytes // max(1, B * D * itemsize)))
        if block_rows >= 8:
            block_rows = (block_rows // 8) * 8   # sublane-friendly
    block_rows = int(min(block_rows, S))
    num_blocks = pl.cdiv(S, block_rows)

    kernel = functools.partial(_pos_enc_dropout_kernel, p=float(p),
                               training=bool(training), block_rows=block_rows)

    seed_arr = jnp.asarray([seed], dtype=jnp.int32)

    cost = pl.CostEstimate(
        flops=S * B * D,
        transcendentals=0,
        bytes_accessed=(2 * S * B * D + S * D) * itemsize)

    grid_spec = pltpu.PrefetchScalarGridSpec(
        num_scalar_prefetch=1,                   # seed lives in SMEM across steps
        grid=(num_blocks,),
        in_specs=[
            pl.BlockSpec((block_rows, B, D), lambda i, seed: (i, 0, 0)),   # x
            pl.BlockSpec((block_rows, 1, D), lambda i, seed: (i, 0, 0)),   # pe[:S]
        ],
        out_specs=pl.BlockSpec((block_rows, B, D), lambda i, seed: (i, 0, 0)),
    )

    # NOTE: for best vreg/lane utilization d_model should be a multiple of 128;
    # the kernel is correct (just less lane-dense) for small D/B like the test.
    return pl.pallas_call(
        kernel,
        grid_spec=grid_spec,
        out_shape=jax.ShapeDtypeStruct((S, B, D), x.dtype),
        compiler_params=pltpu.CompilerParams(
            dimension_semantics=("parallel",),     # lets v7x split tiles over 2 TCs
            vmem_limit_bytes=vmem_limit_bytes),
        cost_estimate=cost,
    )(seed_arr, x, pe_slice)


if __name__ == "__main__":
    # Small shapes consistent with the module's forward: (seq, batch, d_model)
    S, B, D = 8, 2, 32
    MAX_LEN = 64
    P = 0.1

    key = jax.random.PRNGKey(0)
    x = jax.random.normal(key, (S, B, D), dtype=jnp.float32)
    pe = make_positional_encoding_table(D, MAX_LEN)
    ref = x + pe[:S]                             # plain-JAX reference (eval mode)

    # --- eval mode (dropout = identity): deterministic check
    out_eval = jax.block_until_ready(
        positional_encoding_forward(x, pe, p=P, training=False))
    assert out_eval.shape == (S, B, D)
    assert out_eval.dtype == x.dtype
    assert jnp.allclose(out_eval, ref, atol=1e-6, rtol=1e-6), "eval-mode mismatch"

    # --- bf16 eval path (math stays in bf16; pe pre-cast in the wrapper)
    x_bf16 = x.astype(jnp.bfloat16)
    out_bf16 = jax.block_until_ready(
        positional_encoding_forward(x_bf16, pe, p=P, training=False))
    ref_bf16 = x_bf16 + pe[:S].astype(jnp.bfloat16)
    assert out_bf16.dtype == jnp.bfloat16
    assert jnp.allclose(out_bf16.astype(jnp.float32),
                        ref_bf16.astype(jnp.float32), atol=1e-2, rtol=1e-2)

    # --- train mode: in-kernel stateless-hash dropout
    out_train = jax.block_until_ready(
        positional_encoding_forward(x, pe, p=P, training=True, seed=1234))
    assert out_train.shape == (S, B, D)
    kept = out_train != 0.0
    # surviving elements must equal (x + pe) / (1 - p)
    assert jnp.allclose(out_train[kept], (ref / (1.0 - P))[kept],
                        atol=1e-5, rtol=1e-5), "train-mode kept-value mismatch"
    drop_frac = 1.0 - float(kept.mean())
    assert 0.0 <= drop_frac <= 0.4, f"implausible drop fraction {drop_frac}"

    print("KERNEL_OK")
</pallas_src>

<mosaic_0001>
module attributes {stable_mosaic.version = 11 : i64} {
  func.func @_pos_enc_dropout_kernel(%arg0: i32, %arg1: memref<1xi32, #tpu.memory_space<smem>>, %arg2: memref<8x2x32xf32, #tpu.memory_space<vmem>>, %arg3: memref<8x1x32xf32, #tpu.memory_space<vmem>>, %arg4: memref<8x2x32xf32, #tpu.memory_space<vmem>>) attributes {dimension_semantics = [#tpu.dimension_semantics<parallel>], iteration_bounds = array<i64: 1>, scalar_prefetch = 1 : i64, scratch_operands = 0 : i64, tpu.core_type = #tpu.core_type<tc>, window_params = [{transform_indices = @transform_0, window_bounds = array<i64: 8, 2, 32>}, {transform_indices = @transform_1, window_bounds = array<i64: 8, 1, 32>}, {transform_indices = @transform_2, window_bounds = array<i64: 8, 2, 32>}]} {
    %c0 = arith.constant 0 : index
    %c0_0 = arith.constant 0 : index
    %c0_1 = arith.constant 0 : index
    %0 = vector.load %arg2[%c0, %c0_0, %c0_1] : memref<8x2x32xf32, #tpu.memory_space<vmem>>, vector<8x2x32xf32>
    %c0_2 = arith.constant 0 : index
    %c0_3 = arith.constant 0 : index
    %c0_4 = arith.constant 0 : index
    %1 = vector.load %arg3[%c0_2, %c0_3, %c0_4] : memref<8x1x32xf32, #tpu.memory_space<vmem>>, vector<8x1x32xf32>
    %2 = vector.broadcast %1 : vector<8x1x32xf32> to vector<8x2x32xf32>
    %3 = arith.addf %0, %2 : vector<8x2x32xf32>
    %c0_5 = arith.constant 0 : index
    %c0_6 = arith.constant 0 : index
    %c0_7 = arith.constant 0 : index
    %4 = vector.load %arg4[%c0_5, %c0_6, %c0_7] : memref<8x2x32xf32, #tpu.memory_space<vmem>>, vector<8x2x32xf32>
    tpu.vector_store %arg4[%c0_5, %c0_6, %c0_7], %3 {strides = array<i32>} : memref<8x2x32xf32, #tpu.memory_space<vmem>>, vector<8x2x32xf32>,
    return
  }
  func.func @transform_0(%arg0: i32, %arg1: memref<1xi32, #tpu.memory_space<smem>>) -> (i32, i32, i32) {
    %c0_i32 = arith.constant 0 : i32
    %c0_i32_0 = arith.constant 0 : i32
    %c0_i32_1 = arith.constant 0 : i32
    return %arg0, %c0_i32, %c0_i32_0 : i32, i32, i32
  }
  func.func @transform_1(%arg0: i32, %arg1: memref<1xi32, #tpu.memory_space<smem>>) -> (i32, i32, i32) {
    %c0_i32 = arith.constant 0 : i32
    %c0_i32_0 = arith.constant 0 : i32
    %c0_i32_1 = arith.constant 0 : i32
    return %arg0, %c0_i32, %c0_i32_0 : i32, i32, i32
  }
  func.func @transform_2(%arg0: i32, %arg1: memref<1xi32, #tpu.memory_space<smem>>) -> (i32, i32, i32) {
    %c0_i32 = arith.constant 0 : i32
    %c0_i32_0 = arith.constant 0 : i32
    %c0_i32_1 = arith.constant 0 : i32
    return %arg0, %c0_i32, %c0_i32_0 : i32, i32, i32
  }
}

</mosaic_0001>

<llo_original>
// kernel: tpu_custom_call.1
$region0: #{tpu_custom_call.1}
  #allocation0 [shape = 'u32[]', space=smem, size = 0x4, offset = 0x4, fixed_abs, tag = 'smem constant byte address 0x4 - core index']
  #allocation1 [shape = 'u32[144,128]{1,0:T(1,128)}', space=vmem, size = 0x12000, scoped, tag = 'internal scratch']
  #allocation2 [shape = 's32[1]{0}', space=sflag, size = 0x4, scoped, tag = 'scoped memory for tpu_custom_call.1']
  #allocation3 [shape = 's32[1]{0:T(128)S(6)}', space=smem, size = 0x200, scoped, tag = 'prefetched SMEM operand 0']
  %s0 = inlined_call_operand.<no memory space> [shape: s32[1], index: 0, kind: input, shape index: {}]
  %s1 = inlined_call_operand.hbm [shape: f32[8,2,32], index: 1, kind: input, shape index: {}]
  %s2 = inlined_call_operand.hbm [shape: f32[8,1,32], index: 2, kind: input, shape index: {}]
  %s3 = inlined_call_operand.hbm [shape: f32[8,2,32], index: 3, kind: output, shape index: {}]
  %s4 = sld [smem:[#allocation0]]
  $region26: #{tpu_custom_call.1} parent=0
    _
  %s6 = ssub.s32 1, %s4
  %s7 = scalar_select 0, %s6, %s4
  %8 = sst [smem:[#allocation3]] %s0
  $region1: #{tpu_custom_call.1} parent=0
    #allocation4 [shape = 'u8[8192]{0}', space=vmem, size = 0x2000, scoped, tag = 'input window, operand 1, single buffered']
    #allocation5 [shape = 's32[1]{0}', space=sflag, size = 0x4, scoped, tag = 'scoped memory for tpu_custom_call.1']
    #allocation6 [shape = 's32[1]{0}', space=sflag, size = 0x4, scoped, tag = 'scoped memory for tpu_custom_call.1']
    #allocation7 [shape = 'u8[4096]{0}', space=vmem, size = 0x1000, scoped, tag = 'input window, operand 2, single buffered']
    #allocation8 [shape = 's32[1]{0}', space=sflag, size = 0x4, scoped, tag = 'scoped memory for tpu_custom_call.1']
    #allocation9 [shape = 'u8[8192]{0}', space=vmem, size = 0x2000, scoped, tag = 'output window, operand 0, single buffered']
    %9 = vsyncpa [#allocation5], 0
    %10 = vsyncpa [#allocation8], 0
    %11 = vsyncpa [#allocation6], 0
    // Predicated region
    $region2: #{tpu_custom_call.1} parent=1 // pred_check
      _
    $region3: #{tpu_custom_call.1} parent=1 // pred_check_branch
      %13 = sbr.rel (0) target = $region5
    $region4: #{tpu_custom_call.1} parent=1 // pred_region
      %s15 = ssub.s32 256, 256
      %16 = vsyncadd [#allocation5], %s15
      %s17 = sshll.u32 [#allocation4], 4
      %s18 = int_to_ptr.vmem [resolvable:$true] %s17
      %23 = dma.hbm_to_vmem [thread:$0]  %s1, 256, %s18, [#allocation5], 32, 32, 2
    $region5: #{tpu_custom_call.1} parent=1 // pred_fallthru
      _
    // Predicated region
    $region6: #{tpu_custom_call.1} parent=1 // pred_check
      _
    $region7: #{tpu_custom_call.1} parent=1 // pred_check_branch
      %25 = sbr.rel (0) target = $region9
    $region8: #{tpu_custom_call.1} parent=1 // pred_region
      %s27 = ssub.s32 128, 128
      %28 = vsyncadd [#allocation8], %s27
      %s29 = sshll.u32 [#allocation7], 4
      %s30 = int_to_ptr.vmem [resolvable:$true] %s29
      %35 = dma.hbm_to_vmem [thread:$0]  %s2, 128, %s30, [#allocation8], 16, 16, 1
    $region9: #{tpu_custom_call.1} parent=1 // pred_fallthru
      _
    // Predicated region
    $region10: #{tpu_custom_call.1} parent=1 // pred_check
      _
    $region11: #{tpu_custom_call.1} parent=1 // pred_check_branch
      %37 = sbr.rel (0) target = $region13
    $region12: #{tpu_custom_call.1} parent=1 // pred_region
      %38 = dma.done [#allocation5], 256
    $region13: #{tpu_custom_call.1} parent=1 // pred_fallthru
      _
    // Predicated region
    $region14: #{tpu_custom_call.1} parent=1 // pred_check
      _
    $region15: #{tpu_custom_call.1} parent=1 // pred_check_branch
      %40 = sbr.rel (0) target = $region17
    $region16: #{tpu_custom_call.1} parent=1 // pred_region
      %41 = dma.done [#allocation8], 128
    $region17: #{tpu_custom_call.1} parent=1 // pred_fallthru
      _
    %v42 = vld [vmem:[#allocation4] sm:$0x3]
    %v43 = vld [vmem:[#allocation4 + $0x2] sm:$0x3]
    %v44 = vld [vmem:[#allocation4 + $0x4] sm:$0x3]
    %v45 = vld [vmem:[#allocation4 + $0x6] sm:$0x3]
    %v46 = vld [vmem:[#allocation4 + $0x8] sm:$0x3]
    %v47 = vld [vmem:[#allocation4 + $0xa] sm:$0x3]
    %v48 = vld [vmem:[#allocation4 + $0xc] sm:$0x3]
    %v49 = vld [vmem:[#allocation4 + $0xe] sm:$0x3]
    %v50 = vld [vmem:[#allocation7] sm:$0x1]
    %v51 = vld [vmem:[#allocation7 + $0x1] sm:$0x1]
    %v52 = vld [vmem:[#allocation7 + $0x2] sm:$0x1]
    %v53 = vld [vmem:[#allocation7 + $0x3] sm:$0x1]
    %v54 = vld [vmem:[#allocation7 + $0x4] sm:$0x1]
    %v55 = vld [vmem:[#allocation7 + $0x5] sm:$0x1]
    %v56 = vld [vmem:[#allocation7 + $0x6] sm:$0x1]
    %v57 = vld [vmem:[#allocation7 + $0x7] sm:$0x1]
    %v66 = vlaneseq
    %v67 = vshrl.u32 %v66, 7
    %v68 = vsub.s32 0, %v67
    %v69 = vrot.slane %v50, %v68
    %v70 = vlaneseq
    %v71 = vshrl.u32 %v70, 7
    %v72 = vsub.s32 0, %v71
    %v73 = vrot.slane %v51, %v72
    %v74 = vlaneseq
    %v75 = vshrl.u32 %v74, 7
    %v76 = vsub.s32 0, %v75
    %v77 = vrot.slane %v52, %v76
    %v78 = vlaneseq
    %v79 = vshrl.u32 %v78, 7
    %v80 = vsub.s32 0, %v79
    %v81 = vrot.slane %v53, %v80
    %v82 = vlaneseq
    %v83 = vshrl.u32 %v82, 7
    %v84 = vsub.s32 0, %v83
    %v85 = vrot.slane %v54, %v84
    %v86 = vlaneseq
    %v87 = vshrl.u32 %v86, 7
    %v88 = vsub.s32 0, %v87
    %v89 = vrot.slane %v55, %v88
    %v90 = vlaneseq
    %v91 = vshrl.u32 %v90, 7
    %v92 = vsub.s32 0, %v91
    %v93 = vrot.slane %v56, %v92
    %v94 = vlaneseq
    %v95 = vshrl.u32 %v94, 7
    %v96 = vsub.s32 0, %v95
    %v97 = vrot.slane %v57, %v96
    %v106 = vadd.f32 %v42, %v69
    %v107 = vadd.f32 %v43, %v73
    %v108 = vadd.f32 %v44, %v77
    %v109 = vadd.f32 %v45, %v81
    %v110 = vadd.f32 %v46, %v85
    %v111 = vadd.f32 %v47, %v89
    %v112 = vadd.f32 %v48, %v93
    %v113 = vadd.f32 %v49, %v97
    %vm114 = vcmask 254976
    %115 = vst.msk [vmem:[#allocation9] sm:$0x3] %vm114, %v106
    %116 = vst.msk [vmem:[#allocation9 + $0x2] sm:$0x3] %vm114, %v107
    %117 = vst.msk [vmem:[#allocation9 + $0x4] sm:$0x3] %vm114, %v108
    %118 = vst.msk [vmem:[#allocation9 + $0x6] sm:$0x3] %vm114, %v109
    %119 = vst.msk [vmem:[#allocation9 + $0x8] sm:$0x3] %vm114, %v110
    %120 = vst.msk [vmem:[#allocation9 + $0xa] sm:$0x3] %vm114, %v111
    %121 = vst.msk [vmem:[#allocation9 + $0xc] sm:$0x3] %vm114, %v112
    %122 = vst.msk [vmem:[#allocation9 + $0xe] sm:$0x3] %vm114, %v113
    // Predicated region
    $region18: #{tpu_custom_call.1} parent=1 // pred_check
      _
    $region19: #{tpu_custom_call.1} parent=1 // pred_check_branch
      %124 = sbr.rel (0) target = $region21
    $region20: #{tpu_custom_call.1} parent=1 // pred_region
      %s126 = ssub.s32 256, 256
      %127 = vsyncadd [#allocation6], %s126
      %s128 = sshll.u32 [#allocation9], 4
      %s129 = int_to_ptr.vmem [resolvable:$true] %s128
      %134 = dma.vmem_to_hbm [thread:$0]  %s129, 256, %s3, [#allocation6], 32, 32, 2
    $region21: #{tpu_custom_call.1} parent=1 // pred_fallthru
      _
    // Predicated region
    $region22: #{tpu_custom_call.1} parent=1 // pred_check
      _
    $region23: #{tpu_custom_call.1} parent=1 // pred_check_branch
      %136 = sbr.rel (0) target = $region25
    $region24: #{tpu_custom_call.1} parent=1 // pred_region
      %137 = dma.done [#allocation6], 256
    $region25: #{tpu_custom_call.1} parent=1 // pred_fallthru
      _
    %138 = vsyncpa [#allocation5], 1
    %139 = vsyncpa [#allocation8], 1
    %140 = vsyncpa [#allocation6], 1

</llo_original>
